<compile_context>
chip_gen: v7x
topology: tpu7x:2x2x1
jax: 0.10.0
libtpu: 0.0.40
codegen_flags: <defaults>
</compile_context>

<pallas_src>
import math
from functools import partial

import jax
import jax.numpy as jnp
from jax.experimental import pallas as pl
from jax.experimental.pallas import tpu as pltpu


_SUBLANES = 8     # f32 sublane tile height
_LANES = 128      # lane width


# ----------------------------- Pallas kernel --------------------------------
def _theta_kernel(p_ref, alpha_ref, scale_ref, offset_ref, o_ref, *, approx):
    # para = clamp(p, -10, 10); theta = offset + scale * sigmoid(para - alpha)
    x = jnp.clip(p_ref[...], -10.0, 10.0) - alpha_ref[...]
    # Numerically stable sigmoid: exp(-x) saturates to 0 for large x instead of
    # overflowing; approx reciprocal lowers to the EUP slot (free next to exp).
    sig = pl.reciprocal(1.0 + jnp.exp(-x), approx=approx)
    o_ref[...] = offset_ref[...] + scale_ref[...] * sig


def theta_forward_batched_pallas(parameter_value, alpha, lb, ub,
                                 *, block_lanes=2048, approx_reciprocal=True):
    """Evaluate N Theta modules in one kernel.

    parameter_value / alpha / lb / ub: 1-D arrays of length N (one entry per
    Theta). Returns theta values of shape (N,), float32.
    """
    p = jnp.asarray(parameter_value, jnp.float32).ravel()
    a = jnp.asarray(alpha, jnp.float32).ravel()
    lb = jnp.asarray(lb, jnp.float32).ravel()
    ub = jnp.asarray(ub, jnp.float32).ravel()
    n = p.shape[0]

    # Hoisted constant folding (wrapper side): kernel only sees scale/offset.
    scale = ub - lb
    offset = lb

    # Lay the N thetas out as an (8, C) f32 slab with C a lane-dense multiple
    # of 128, rounded so the lane axis divides evenly into the block width.
    cols = max(pl.cdiv(n, _SUBLANES), 1)
    cols = pl.cdiv(cols, _LANES) * _LANES
    block_c = min(block_lanes, cols)
    cols = pl.cdiv(cols, block_c) * block_c
    total = _SUBLANES * cols

    def pad2d(v):
        return jnp.pad(v, (0, total - n)).reshape(_SUBLANES, cols)

    p2, a2, s2, o2 = pad2d(p), pad2d(a), pad2d(scale), pad2d(offset)

    spec = pl.BlockSpec((_SUBLANES, block_c), lambda j: (0, j))
    out = pl.pallas_call(
        partial(_theta_kernel, approx=approx_reciprocal),
        out_shape=jax.ShapeDtypeStruct((_SUBLANES, cols), jnp.float32),
        grid=(cols // block_c,),
        in_specs=[spec, spec, spec, spec],
        out_specs=spec,
        compiler_params=pltpu.CompilerParams(
            dimension_semantics=("parallel",)),
    )(p2, a2, s2, o2)
    return out.reshape(-1)[:n]


# ----------------------- single-scalar fast path (no Pallas) ----------------
def theta_forward_scalar(parameter_value, alpha, lb, ub):
    """One Theta: a pallas_call is pure overhead — one fused XLA elementwise op."""
    para = jnp.clip(jnp.float32(parameter_value), -10.0, 10.0)
    return jnp.float32(lb) + (jnp.float32(ub) - jnp.float32(lb)) * jax.nn.sigmoid(
        para - jnp.float32(alpha))


# ----------------------- Theta.__init__ parameter setup ---------------------
def make_theta_params(*init_value):
    """Replicates Theta.__init__ bound / alpha / parameter_value logic."""
    lb = 1e-6
    ub = 1000000.0
    iv = 0.0
    if len(init_value) > 3:
        raise Exception("it must be len(init_value) < 3")
    if len(init_value) == 1:
        iv = init_value[0]
        if lb > init_value[0]:
            lb = init_value[0]
        if ub < init_value[0]:
            ub = init_value[0]
    elif len(init_value) == 2:
        if init_value[1] < init_value[0]:
            raise Exception("lower value must be lower than upper value.")
        lb = init_value[0]
        iv = (init_value[0] + init_value[1]) / 2
        ub = init_value[1]
    elif len(init_value) == 3:
        if init_value[1] < init_value[0]:
            raise Exception("lower value must be lower than initial value.")
        if init_value[1] > init_value[2]:
            raise Exception("upper value must be upper than initial value.")
        lb = init_value[0]
        iv = init_value[1]
        ub = init_value[2]
    frac = (iv - lb) / (ub - lb)
    alpha = 0.1 - math.log(frac / (1.0 - frac))
    parameter_value = 0.1  # nn.Parameter(tc.tensor(0.1))
    return parameter_value, alpha, lb, ub


# ------------------------------- reference ----------------------------------
def theta_forward_ref(parameter_value, alpha, lb, ub):
    p = jnp.asarray(parameter_value, jnp.float32)
    a = jnp.asarray(alpha, jnp.float32)
    lb = jnp.asarray(lb, jnp.float32)
    ub = jnp.asarray(ub, jnp.float32)
    para = jnp.clip(p, -10.0, 10.0)
    e = jnp.exp(para - a)
    return e / (e + 1.0) * (ub - lb) + lb


if __name__ == "__main__":
    # A handful of Theta modules, exactly as torchpm would construct them.
    theta_defs = [
        (0.5, 1.5, 3.0),
        (2.0,),
        (0.1, 5.0),
        (1e-3, 0.02, 1.0),
    ]
    params = [make_theta_params(*d) for d in theta_defs]
    p0 = jnp.array([p[0] for p in params], jnp.float32)
    alpha = jnp.array([p[1] for p in params], jnp.float32)
    lb = jnp.array([p[2] for p in params], jnp.float32)
    ub = jnp.array([p[3] for p in params], jnp.float32)

    # Deterministically perturb the learnable scalars (stay inside clamp range).
    key = jax.random.PRNGKey(0)
    p_val = p0 + jax.random.uniform(key, p0.shape, jnp.float32, -1.0, 1.0)

    # Batched Pallas kernel: all thetas in one lane-dense call.
    theta = theta_forward_batched_pallas(p_val, alpha, lb, ub)
    theta = jax.block_until_ready(theta)

    expected = theta_forward_ref(p_val, alpha, lb, ub)
    # Tolerance accounts for the EUP approx reciprocal in the kernel.
    assert jnp.allclose(theta, expected, rtol=1e-2, atol=1e-3), (theta, expected)

    # Single-scalar fast path (no Pallas launch) matches the reference tightly.
    t0 = theta_forward_scalar(p_val[0], alpha[0], lb[0], ub[0])
    assert jnp.allclose(t0, expected[0], rtol=1e-5, atol=1e-5), (t0, expected[0])

    print("KERNEL_OK")
</pallas_src>

<mosaic_0001>
module attributes {stable_mosaic.version = 11 : i64} {
  func.func @_theta_kernel(%arg0: i32, %arg1: memref<8x128xf32, #tpu.memory_space<vmem>>, %arg2: memref<8x128xf32, #tpu.memory_space<vmem>>, %arg3: memref<8x128xf32, #tpu.memory_space<vmem>>, %arg4: memref<8x128xf32, #tpu.memory_space<vmem>>, %arg5: memref<8x128xf32, #tpu.memory_space<vmem>>) attributes {dimension_semantics = [#tpu.dimension_semantics<parallel>], iteration_bounds = array<i64: 1>, scalar_prefetch = 0 : i64, scratch_operands = 0 : i64, tpu.core_type = #tpu.core_type<tc>, window_params = [{transform_indices = @transform_0, window_bounds = array<i64: 8, 128>}, {transform_indices = @transform_1, window_bounds = array<i64: 8, 128>}, {transform_indices = @transform_2, window_bounds = array<i64: 8, 128>}, {transform_indices = @transform_3, window_bounds = array<i64: 8, 128>}, {transform_indices = @transform_4, window_bounds = array<i64: 8, 128>}]} {
    %c0 = arith.constant 0 : index
    %c0_0 = arith.constant 0 : index
    %0 = vector.load %arg1[%c0, %c0_0] : memref<8x128xf32, #tpu.memory_space<vmem>>, vector<8x128xf32>
    %cst = arith.constant -1.000000e+01 : f32
    %cst_1 = arith.constant 1.000000e+01 : f32
    %1 = vector.broadcast %cst : f32 to vector<8x128xf32>
    %2 = arith.maximumf %1, %0 : vector<8x128xf32>
    %3 = vector.broadcast %cst_1 : f32 to vector<8x128xf32>
    %4 = arith.minimumf %3, %2 : vector<8x128xf32>
    %c0_2 = arith.constant 0 : index
    %c0_3 = arith.constant 0 : index
    %5 = vector.load %arg2[%c0_2, %c0_3] : memref<8x128xf32, #tpu.memory_space<vmem>>, vector<8x128xf32>
    %6 = arith.subf %4, %5 : vector<8x128xf32>
    %cst_4 = arith.constant 0.000000e+00 : f32
    %7 = vector.broadcast %cst_4 : f32 to vector<8x128xf32>
    %8 = arith.subf %7, %6 : vector<8x128xf32>
    %9 = math.exp %8 : vector<8x128xf32>
    %cst_5 = arith.constant 1.000000e+00 : f32
    %10 = vector.broadcast %cst_5 : f32 to vector<8x128xf32>
    %11 = arith.addf %10, %9 : vector<8x128xf32>
    %12 = tpu.reciprocal %11 {approx = true} : vector<8x128xf32> -> vector<8x128xf32>
    %c0_6 = arith.constant 0 : index
    %c0_7 = arith.constant 0 : index
    %13 = vector.load %arg4[%c0_6, %c0_7] : memref<8x128xf32, #tpu.memory_space<vmem>>, vector<8x128xf32>
    %c0_8 = arith.constant 0 : index
    %c0_9 = arith.constant 0 : index
    %14 = vector.load %arg3[%c0_8, %c0_9] : memref<8x128xf32, #tpu.memory_space<vmem>>, vector<8x128xf32>
    %15 = arith.mulf %14, %12 : vector<8x128xf32>
    %16 = arith.addf %13, %15 : vector<8x128xf32>
    %c0_10 = arith.constant 0 : index
    %c0_11 = arith.constant 0 : index
    %17 = vector.load %arg5[%c0_10, %c0_11] : memref<8x128xf32, #tpu.memory_space<vmem>>, vector<8x128xf32>
    tpu.vector_store %arg5[%c0_10, %c0_11], %16 {strides = array<i32>} : memref<8x128xf32, #tpu.memory_space<vmem>>, vector<8x128xf32>,
    return
  }
  func.func @transform_0(%arg0: i32) -> (i32, i32) {
    %c0_i32 = arith.constant 0 : i32
    %c0_i32_0 = arith.constant 0 : i32
    return %c0_i32, %arg0 : i32, i32
  }
  func.func @transform_1(%arg0: i32) -> (i32, i32) {
    %c0_i32 = arith.constant 0 : i32
    %c0_i32_0 = arith.constant 0 : i32
    return %c0_i32, %arg0 : i32, i32
  }
  func.func @transform_2(%arg0: i32) -> (i32, i32) {
    %c0_i32 = arith.constant 0 : i32
    %c0_i32_0 = arith.constant 0 : i32
    return %c0_i32, %arg0 : i32, i32
  }
  func.func @transform_3(%arg0: i32) -> (i32, i32) {
    %c0_i32 = arith.constant 0 : i32
    %c0_i32_0 = arith.constant 0 : i32
    return %c0_i32, %arg0 : i32, i32
  }
  func.func @transform_4(%arg0: i32) -> (i32, i32) {
    %c0_i32 = arith.constant 0 : i32
    %c0_i32_0 = arith.constant 0 : i32
    return %c0_i32, %arg0 : i32, i32
  }
}

</mosaic_0001>

<llo_original>
// kernel: tpu_custom_call.1
$region0: #{tpu_custom_call.1}
  #allocation0 [shape = 'u32[]', space=smem, size = 0x4, offset = 0x4, fixed_abs, tag = 'smem constant byte address 0x4 - core index']
  #allocation1 [shape = 'u32[144,128]{1,0:T(1,128)}', space=vmem, size = 0x12000, scoped, tag = 'internal scratch']
  %s0 = inlined_call_operand.hbm [shape: f32[8,128], index: 0, kind: input, shape index: {}]
  %s1 = inlined_call_operand.hbm [shape: f32[8,128], index: 1, kind: input, shape index: {}]
  %s2 = inlined_call_operand.hbm [shape: f32[8,128], index: 2, kind: input, shape index: {}]
  %s3 = inlined_call_operand.vmem [shape: f32[8,128], index: 3, kind: input, shape index: {}]
  %s4 = inlined_call_operand.hbm [shape: f32[8,128], index: 4, kind: output, shape index: {}]
  %s5 = sld [smem:[#allocation0]]
  $region38: #{tpu_custom_call.1} parent=0
    _
  %s7 = ssub.s32 1, %s5
  %s8 = scalar_select 0, %s7, %s5
  $region1: #{tpu_custom_call.1} parent=0
    #allocation2 [shape = 'u8[4096]{0}', space=vmem, size = 0x1000, scoped, tag = 'input window, operand 0, single buffered']
    #allocation3 [shape = 's32[1]{0}', space=sflag, size = 0x4, scoped, tag = 'scoped memory for tpu_custom_call.1']
    #allocation4 [shape = 's32[1]{0}', space=sflag, size = 0x4, scoped, tag = 'scoped memory for tpu_custom_call.1']
    #allocation5 [shape = 'u8[4096]{0}', space=vmem, size = 0x1000, scoped, tag = 'input window, operand 1, single buffered']
    #allocation6 [shape = 's32[1]{0}', space=sflag, size = 0x4, scoped, tag = 'scoped memory for tpu_custom_call.1']
    #allocation7 [shape = 'u8[4096]{0}', space=vmem, size = 0x1000, scoped, tag = 'input window, operand 2, single buffered']
    #allocation8 [shape = 'u8[4096]{0}', space=vmem, size = 0x1000, scoped, tag = 'output window, operand 0, single buffered']
    %9 = vsyncpa [#allocation3], 0
    %10 = vsyncpa [#allocation6], 0
    %11 = vsyncpa [#allocation4], 0
    // Predicated region
    $region2: #{tpu_custom_call.1} parent=1 // pred_check
      _
    $region3: #{tpu_custom_call.1} parent=1 // pred_check_branch
      %13 = sbr.rel (0) target = $region5
    $region4: #{tpu_custom_call.1} parent=1 // pred_region
      %s15 = ssub.s32 128, 128
      %16 = vsyncadd [#allocation3], %s15
      %s18 = sshll.u32 [#allocation2], 4
      %s19 = int_to_ptr.vmem [resolvable:$true] %s18
      %21 = dma.hbm_to_vmem [thread:$0]  %s0, 128, %s19, [#allocation3]
    $region5: #{tpu_custom_call.1} parent=1 // pred_fallthru
      _
    // Predicated region
    $region6: #{tpu_custom_call.1} parent=1 // pred_check
      _
    $region7: #{tpu_custom_call.1} parent=1 // pred_check_branch
      %23 = sbr.rel (0) target = $region9
    $region8: #{tpu_custom_call.1} parent=1 // pred_region
      %s25 = ssub.s32 128, 128
      %26 = vsyncadd [#allocation6], %s25
      %s28 = sshll.u32 [#allocation5], 4
      %s29 = int_to_ptr.vmem [resolvable:$true] %s28
      %31 = dma.hbm_to_vmem [thread:$0]  %s1, 128, %s29, [#allocation6]
    $region9: #{tpu_custom_call.1} parent=1 // pred_fallthru
      _
    // Predicated region
    $region10: #{tpu_custom_call.1} parent=1 // pred_check
      _
    $region11: #{tpu_custom_call.1} parent=1 // pred_check_branch
      %33 = sbr.rel (0) target = $region13
    $region12: #{tpu_custom_call.1} parent=1 // pred_region
      %s35 = ssub.s32 128, 128
      %36 = vsyncadd [#allocation6], %s35
      %s38 = sshll.u32 [#allocation7], 4
      %s39 = int_to_ptr.vmem [resolvable:$true] %s38
      %41 = dma.hbm_to_vmem [thread:$0]  %s2, 128, %s39, [#allocation6]
    $region13: #{tpu_custom_call.1} parent=1 // pred_fallthru
      _
    // Predicated region
    $region14: #{tpu_custom_call.1} parent=1 // pred_check
      _
    $region15: #{tpu_custom_call.1} parent=1 // pred_check_branch
      %43 = sbr.rel (0) target = $region17
    $region16: #{tpu_custom_call.1} parent=1 // pred_region
      _
    $region17: #{tpu_custom_call.1} parent=1 // pred_fallthru
      _
    // Predicated region
    $region18: #{tpu_custom_call.1} parent=1 // pred_check
      _
    $region19: #{tpu_custom_call.1} parent=1 // pred_check_branch
      %45 = sbr.rel (0) target = $region21
    $region20: #{tpu_custom_call.1} parent=1 // pred_region
      %46 = dma.done [#allocation3], 128
    $region21: #{tpu_custom_call.1} parent=1 // pred_fallthru
      _
    // Predicated region
    $region22: #{tpu_custom_call.1} parent=1 // pred_check
      _
    $region23: #{tpu_custom_call.1} parent=1 // pred_check_branch
      %48 = sbr.rel (0) target = $region25
    $region24: #{tpu_custom_call.1} parent=1 // pred_region
      %49 = dma.done [#allocation6], 128
    $region25: #{tpu_custom_call.1} parent=1 // pred_fallthru
      _
    // Predicated region
    $region26: #{tpu_custom_call.1} parent=1 // pred_check
      _
    $region27: #{tpu_custom_call.1} parent=1 // pred_check_branch
      %51 = sbr.rel (0) target = $region29
    $region28: #{tpu_custom_call.1} parent=1 // pred_region
      %52 = dma.done [#allocation6], 128
    $region29: #{tpu_custom_call.1} parent=1 // pred_fallthru
      _
    %v53 = vld [vmem:[#allocation2] sm:$0xff]
    %v54 = vmax.f32 %v53, -10.0
    %v55 = vmin.f32 %v54, 10.0
    %v56 = vld [vmem:[#allocation5] sm:$0xff]
    %v57 = vsub.f32 %v55, %v56
    %v58 = vsub.f32 0.0, %v57
    %v59 = vmul.f32 %v58, 1.442695
    %v60 = vpow.pop %v59
    %v61 = vadd.f32 %v60, 1.0
    %v62 = vrcp.pop %v61
    %v63 = vld [vmem:[%s3] sm:$0xff]
    %v64 = vld [vmem:[#allocation7] sm:$0xff]
    %v65 = vmul.f32 %v64, %v62
    %v66 = vadd.f32 %v63, %v65
    %67 = vst [vmem:[#allocation8] sm:$0xff] %v66
    // Predicated region
    $region30: #{tpu_custom_call.1} parent=1 // pred_check
      _
    $region31: #{tpu_custom_call.1} parent=1 // pred_check_branch
      %69 = sbr.rel (0) target = $region33
    $region32: #{tpu_custom_call.1} parent=1 // pred_region
      %s71 = ssub.s32 128, 128
      %72 = vsyncadd [#allocation4], %s71
      %s74 = sshll.u32 [#allocation8], 4
      %s75 = int_to_ptr.vmem [resolvable:$true] %s74
      %77 = dma.vmem_to_hbm [thread:$0]  %s75, 128, %s4, [#allocation4]
    $region33: #{tpu_custom_call.1} parent=1 // pred_fallthru
      _
    // Predicated region
    $region34: #{tpu_custom_call.1} parent=1 // pred_check
      _
    $region35: #{tpu_custom_call.1} parent=1 // pred_check_branch
      %79 = sbr.rel (0) target = $region37
    $region36: #{tpu_custom_call.1} parent=1 // pred_region
      %80 = dma.done [#allocation4], 128
    $region37: #{tpu_custom_call.1} parent=1 // pred_fallthru
      _
    %81 = vsyncpa [#allocation3], 1
    %82 = vsyncpa [#allocation6], 1
    %83 = vsyncpa [#allocation4], 1

</llo_original>
